<compile_context>
chip_gen: v5e
topology: v5e:2x2
jax: 0.10.0
libtpu: 0.0.40
codegen_flags: <defaults>
</compile_context>

<pallas_src>
import jax
import jax.numpy as jnp
import numpy as np
from jax.experimental import pallas as pl
from jax.experimental.pallas import tpu as pltpu


def _silu(x):
    # Numerically-stable SiLU using the approximate EUP reciprocal:
    #   sigmoid(x) = 1/(1+exp(-|x|)) for x >= 0, else 1 - 1/(1+exp(-|x|)).
    # (exp and vrcp both live on the EUP slot; abs/where/sub are cheap VPU ops.)
    z = jnp.exp(-jnp.abs(x))                        # in (0, 1], never overflows
    r = pl.reciprocal(1.0 + z, approx=True)
    return x * jnp.where(x >= 0, r, 1.0 - r)


def einfft_kernel(scal_ref, a_ref, ca_ref, cb_ref, x_ref, o_ref):
    # scal_ref (SMEM, f32): [Re(sum(complex_weight)), Im(sum(complex_weight))]
    wr = scal_ref[0]
    wi = scal_ref[1]

    # t = Re(fft(x, axis=seq)) + Im(fft(x, axis=seq)) = A @ x
    # (bf16 MXU operands, f32 accumulation)
    t = jnp.dot(a_ref[...], x_ref[...], preferred_element_type=jnp.float32)

    # complex multiply by the scalar sum of complex_weight (f32, VPU) + SiLU on both parts
    ra = _silu(t * wr)
    ia = _silu(t * wi)

    # real(ifft(2*emmed)) as two accumulating matmuls (no concat, no (2S,tn) staging buffer):
    #   out = C_a @ ra + C_b @ ia    (R, Re(W), Im(W), 2/S already folded into C_a / C_b)
    out = jnp.dot(ca_ref[...], ra.astype(ca_ref.dtype), preferred_element_type=jnp.float32)
    out = out + jnp.dot(cb_ref[...], ia.astype(cb_ref.dtype), preferred_element_type=jnp.float32)
    o_ref[...] = out.astype(o_ref.dtype)


def _vmem_capacity_bytes():
    try:
        return int(pltpu.get_tpu_info().vmem_capacity_bytes)
    except Exception:
        return 64 * 2 ** 20  # conservative: v7x per-TensorCore VMEM


def _resident_bytes(s, tn, esz, out_esz, const_bufs=2):
    # A, C_a, C_b resident (const_bufs covers the double-buffered fallback), the
    # double-buffered x / out streams, and the live f32 + bf16-cast intermediates.
    dft = const_bufs * 3 * s * s * esz
    stream = 2 * s * tn * esz + 2 * s * tn * out_esz
    live = 7 * s * tn * 4 + 2 * s * tn * esz
    return dft + stream + live


def _pick_n_tile(n_pad, s, esz, out_esz, budget, want_two_steps):
    """Largest lane-dense column tile whose working set fits the VMEM budget.

    On low-VMEM / 2-TensorCore parts (v7x-like) prefer >=2 grid steps when that does not
    shrink the tile below 256 lanes; on v5e/v6e the largest single-step tile wins.
    """
    cands = [t for t in (4096, 2048, 1024, 512, 256, 128) if t <= n_pad and n_pad % t == 0]
    if not cands:
        cands = [n_pad]
    fitting = [t for t in cands
               if _resident_bytes(s, t, esz, out_esz) <= budget]
    if not fitting:
        fitting = [cands[-1]]
    if want_two_steps:
        split = [t for t in fitting if n_pad // t >= 2 and t >= 256]
        if split:
            return split[0]
    return fitting[0]


def ein_fft_text(x, complex_weight, real_weight, *,
                 mm_dtype=jnp.bfloat16, out_dtype=jnp.float32):
    b, s, d = x.shape
    n = b * d

    # Parameter reductions: the 'bsd,cf->bsd' einsums sum the full weight matrices, so only
    # three scalars matter. Only Re/Im of sum(complex_weight) reach the kernel; the second
    # einsum's scalars are folded into the inverse-DFT matrices below.
    wr_sum = jnp.sum(jnp.real(complex_weight)).astype(jnp.float32)
    wi_sum = jnp.sum(jnp.imag(complex_weight)).astype(jnp.float32)
    r_sum = jnp.sum(real_weight).astype(jnp.float32)
    scalars = jnp.stack([wr_sum, wi_sum]).astype(jnp.float32)

    # DFT matrices built in float64 on the host.
    k = np.arange(s)
    ang = 2.0 * np.pi * np.outer(k, k) / s                              # (S, S)
    a_np = (np.cos(ang) - np.sin(ang)).astype(np.float32)               # fwd: Re + Im of FFT
    c_cos = (2.0 * np.cos(ang) / s).astype(np.float32)                  # inverse, real path
    c_sin = (-2.0 * np.sin(ang) / s).astype(np.float32)                 # inverse, imag path

    a_mat = jnp.asarray(a_np).astype(mm_dtype)
    # Fold scalar weight sums into the inverse DFT (once per call, O(S^2)):
    #   out = C_cos@(R*ra + Re(W)*ia) + C_sin@(Im(W)*ia)
    #       = (R*C_cos) @ ra + (Re(W)*C_cos + Im(W)*C_sin) @ ia
    ca_mat = (r_sum * jnp.asarray(c_cos)).astype(mm_dtype)
    cb_mat = (wr_sum * jnp.asarray(c_cos) + wi_sum * jnp.asarray(c_sin)).astype(mm_dtype)

    # Lane-dense column layout: (B, S, D) -> (S, B*D); zero-pad columns to a multiple of 128
    # so the output spec stays lane-dense (unmasked vst, full MXU columns).
    x2 = jnp.transpose(x, (1, 0, 2)).reshape(s, n).astype(mm_dtype)
    n_pad = ((n + 127) // 128) * 128
    if n_pad != n:
        x2 = jnp.pad(x2, ((0, 0), (0, n_pad - n)))

    esz = jnp.dtype(mm_dtype).itemsize
    out_esz = jnp.dtype(out_dtype).itemsize

    vmem_cap = _vmem_capacity_bytes()
    budget = int(0.80 * vmem_cap)                  # leave headroom for Mosaic scratch
    want_two_steps = vmem_cap <= 96 * 2 ** 20      # v7x-like: 2 TensorCores, 64 MiB VMEM
    tn = _pick_n_tile(n_pad, s, esz, out_esz, budget, want_two_steps)
    grid = (n_pad // tn,)

    need = _resident_bytes(s, tn, esz, out_esz)
    vmem_limit = int(min(budget, max(2 * need, 16 * 2 ** 20)))

    cost = pl.CostEstimate(
        flops=int(6 * s * s * n_pad + 8 * s * n_pad),
        transcendentals=int(4 * s * n_pad),
        bytes_accessed=int(s * n_pad * (esz + out_esz) + 3 * s * s * esz + 8),
    )

    def build(single_buffer_consts):
        const_kw = dict(pipeline_mode=pl.Buffered(1)) if single_buffer_consts else {}
        return pl.pallas_call(
            einfft_kernel,
            out_shape=jax.ShapeDtypeStruct((s, n_pad), out_dtype),
            grid=grid,
            in_specs=[
                pl.BlockSpec(memory_space=pltpu.SMEM),                # [Re(W), Im(W)]
                pl.BlockSpec((s, s), lambda j: (0, 0), **const_kw),   # A   (fwd DFT)
                pl.BlockSpec((s, s), lambda j: (0, 0), **const_kw),   # C_a (inv DFT, R folded)
                pl.BlockSpec((s, s), lambda j: (0, 0), **const_kw),   # C_b (inv DFT, W folded)
                pl.BlockSpec((s, tn), lambda j: (0, j)),              # x columns (lane-dense)
            ],
            out_specs=pl.BlockSpec((s, tn), lambda j: (0, j)),
            compiler_params=pltpu.CompilerParams(
                dimension_semantics=("parallel",),
                vmem_limit_bytes=vmem_limit,
            ),
            cost_estimate=cost,
        )

    args = (scalars, a_mat, ca_mat, cb_mat, x2)
    try:
        out2 = build(True)(*args)
    except Exception:
        # pipeline_mode=pl.Buffered(1) not accepted by this jax/libtpu build -> fall back to
        # default double buffering of the constant DFT matrices.
        out2 = build(False)(*args)

    # Drop column padding and unfold back to (B, S, D).
    out2 = out2[:, :n]
    return jnp.transpose(out2.reshape(s, b, d), (1, 0, 2))


def reference(x, complex_weight, real_weight):
    """Pure-JAX transcription of the PyTorch forward, for validation."""
    f = jnp.fft.fft(x, axis=-2)
    xr, xi = jnp.real(f), jnp.imag(f)
    wsum = jnp.sum(complex_weight)
    einsum_mul = (xr + xi) * wsum
    xr2, xi2 = jnp.real(einsum_mul), jnp.imag(einsum_mul)
    ra, ia = jax.nn.silu(xr2), jax.nn.silu(xi2)
    emmed = ra * jnp.sum(real_weight) + ia * wsum
    return jnp.real(jnp.fft.ifft(emmed + emmed, axis=-2))


if __name__ == "__main__":
    B, S, D = 2, 16, 32  # batch, sequence_length, dim

    key = jax.random.PRNGKey(0)
    kx, kcr, kci, krw = jax.random.split(key, 4)

    x = jax.random.normal(kx, (B, S, D), dtype=jnp.float32)
    complex_weight = (jax.random.normal(kcr, (S, D), dtype=jnp.float32)
                      + 1j * jax.random.normal(kci, (S, D), dtype=jnp.float32)
                      ).astype(jnp.complex64)
    real_weight = jax.random.normal(krw, (S, D), dtype=jnp.float32)

    ref = reference(x, complex_weight, real_weight)
    scale = float(jnp.max(jnp.abs(ref))) + 1e-6

    # f32-matmul path: validates the DFT-matmul formulation (tolerance covers the
    # approximate EUP reciprocal used in SiLU).
    out_f32 = jax.block_until_ready(
        ein_fft_text(x, complex_weight, real_weight, mm_dtype=jnp.float32))
    err_f32 = float(jnp.max(jnp.abs(out_f32 - ref)))
    assert err_f32 / scale < 1e-2, f"f32 mismatch: max abs err {err_f32}, ref scale {scale}"

    # bf16-MXU fast path (default): looser tolerance for bf16 operand rounding of the DFT
    # matrices and of the post-SiLU activations (accumulation stays f32).
    out_bf16 = jax.block_until_ready(ein_fft_text(x, complex_weight, real_weight))
    err_bf16 = float(jnp.max(jnp.abs(out_bf16 - ref)))
    assert err_bf16 / scale < 5e-2, f"bf16 mismatch: max abs err {err_bf16}, ref scale {scale}"

    print("KERNEL_OK")
</pallas_src>

<mosaic_0001>
module attributes {stable_mosaic.version = 11 : i64} {
  func.func @einfft_kernel(%arg0: i32, %arg1: memref<2xf32, #tpu.memory_space<smem>>, %arg2: memref<16x16xf32, #tpu.memory_space<vmem>>, %arg3: memref<16x16xf32, #tpu.memory_space<vmem>>, %arg4: memref<16x16xf32, #tpu.memory_space<vmem>>, %arg5: memref<16x128xf32, #tpu.memory_space<vmem>>, %arg6: memref<16x128xf32, #tpu.memory_space<vmem>>) attributes {dimension_semantics = [#tpu.dimension_semantics<parallel>], iteration_bounds = array<i64: 1>, scalar_prefetch = 0 : i64, scratch_operands = 0 : i64, tpu.core_type = #tpu.core_type<tc>, window_params = [{transform_indices = @transform_0, window_bounds = array<i64: 2>}, {pipeline_mode = #tpu.pipeline_mode<synchronous>, transform_indices = @transform_1, window_bounds = array<i64: 16, 16>}, {pipeline_mode = #tpu.pipeline_mode<synchronous>, transform_indices = @transform_2, window_bounds = array<i64: 16, 16>}, {pipeline_mode = #tpu.pipeline_mode<synchronous>, transform_indices = @transform_3, window_bounds = array<i64: 16, 16>}, {transform_indices = @transform_4, window_bounds = array<i64: 16, 128>}, {transform_indices = @transform_5, window_bounds = array<i64: 16, 128>}]} {
    %c0 = arith.constant 0 : index
    %0 = memref.load %arg1[%c0] : memref<2xf32, #tpu.memory_space<smem>>
    %c1 = arith.constant 1 : index
    %1 = memref.load %arg1[%c1] : memref<2xf32, #tpu.memory_space<smem>>
    %c0_0 = arith.constant 0 : index
    %c0_1 = arith.constant 0 : index
    %2 = vector.load %arg2[%c0_0, %c0_1] : memref<16x16xf32, #tpu.memory_space<vmem>>, vector<16x16xf32>
    %c0_2 = arith.constant 0 : index
    %c0_3 = arith.constant 0 : index
    %3 = vector.load %arg5[%c0_2, %c0_3] : memref<16x128xf32, #tpu.memory_space<vmem>>, vector<16x128xf32>
    %cst = arith.constant dense<0.000000e+00> : vector<16x128xf32>
    %4 = tpu.matmul %2, %3, %cst {dimension_numbers = #tpu.dot_dimension_numbers<[1], [0], [0], [1], [0, 0, 1, 1], [], []>} : vector<16x16xf32>, vector<16x128xf32>, vector<16x128xf32> -> vector<16x128xf32>
    %5 = vector.broadcast %0 : f32 to vector<16x128xf32>
    %6 = arith.mulf %4, %5 : vector<16x128xf32>
    %7 = math.absf %6 : vector<16x128xf32>
    %cst_4 = arith.constant 0.000000e+00 : f32
    %8 = vector.broadcast %cst_4 : f32 to vector<16x128xf32>
    %9 = arith.subf %8, %7 : vector<16x128xf32>
    %10 = math.exp %9 : vector<16x128xf32>
    %cst_5 = arith.constant 1.000000e+00 : f32
    %11 = vector.broadcast %cst_5 : f32 to vector<16x128xf32>
    %12 = arith.addf %11, %10 : vector<16x128xf32>
    %13 = tpu.reciprocal %12 {approx = true} : vector<16x128xf32> -> vector<16x128xf32>
    %cst_6 = arith.constant 0.000000e+00 : f32
    %14 = vector.broadcast %cst_6 : f32 to vector<16x128xf32>
    %15 = arith.cmpf oge, %6, %14 : vector<16x128xf32>
    %cst_7 = arith.constant 1.000000e+00 : f32
    %16 = vector.broadcast %cst_7 : f32 to vector<16x128xf32>
    %17 = arith.subf %16, %13 : vector<16x128xf32>
    %18 = arith.select %15, %13, %17 : vector<16x128xi1>, vector<16x128xf32>
    %19 = arith.mulf %6, %18 : vector<16x128xf32>
    %20 = vector.broadcast %1 : f32 to vector<16x128xf32>
    %21 = arith.mulf %4, %20 : vector<16x128xf32>
    %22 = math.absf %21 : vector<16x128xf32>
    %cst_8 = arith.constant 0.000000e+00 : f32
    %23 = vector.broadcast %cst_8 : f32 to vector<16x128xf32>
    %24 = arith.subf %23, %22 : vector<16x128xf32>
    %25 = math.exp %24 : vector<16x128xf32>
    %cst_9 = arith.constant 1.000000e+00 : f32
    %26 = vector.broadcast %cst_9 : f32 to vector<16x128xf32>
    %27 = arith.addf %26, %25 : vector<16x128xf32>
    %28 = tpu.reciprocal %27 {approx = true} : vector<16x128xf32> -> vector<16x128xf32>
    %cst_10 = arith.constant 0.000000e+00 : f32
    %29 = vector.broadcast %cst_10 : f32 to vector<16x128xf32>
    %30 = arith.cmpf oge, %21, %29 : vector<16x128xf32>
    %cst_11 = arith.constant 1.000000e+00 : f32
    %31 = vector.broadcast %cst_11 : f32 to vector<16x128xf32>
    %32 = arith.subf %31, %28 : vector<16x128xf32>
    %33 = arith.select %30, %28, %32 : vector<16x128xi1>, vector<16x128xf32>
    %34 = arith.mulf %21, %33 : vector<16x128xf32>
    %c0_12 = arith.constant 0 : index
    %c0_13 = arith.constant 0 : index
    %35 = vector.load %arg3[%c0_12, %c0_13] : memref<16x16xf32, #tpu.memory_space<vmem>>, vector<16x16xf32>
    %cst_14 = arith.constant dense<0.000000e+00> : vector<16x128xf32>
    %36 = tpu.matmul %35, %19, %cst_14 {dimension_numbers = #tpu.dot_dimension_numbers<[1], [0], [0], [1], [0, 0, 1, 1], [], []>} : vector<16x16xf32>, vector<16x128xf32>, vector<16x128xf32> -> vector<16x128xf32>
    %c0_15 = arith.constant 0 : index
    %c0_16 = arith.constant 0 : index
    %37 = vector.load %arg4[%c0_15, %c0_16] : memref<16x16xf32, #tpu.memory_space<vmem>>, vector<16x16xf32>
    %cst_17 = arith.constant dense<0.000000e+00> : vector<16x128xf32>
    %38 = tpu.matmul %37, %34, %cst_17 {dimension_numbers = #tpu.dot_dimension_numbers<[1], [0], [0], [1], [0, 0, 1, 1], [], []>} : vector<16x16xf32>, vector<16x128xf32>, vector<16x128xf32> -> vector<16x128xf32>
    %39 = arith.addf %36, %38 : vector<16x128xf32>
    %c0_18 = arith.constant 0 : index
    %c0_19 = arith.constant 0 : index
    %40 = vector.load %arg6[%c0_18, %c0_19] : memref<16x128xf32, #tpu.memory_space<vmem>>, vector<16x128xf32>
    tpu.vector_store %arg6[%c0_18, %c0_19], %39 {strides = array<i32>} : memref<16x128xf32, #tpu.memory_space<vmem>>, vector<16x128xf32>,
    return
  }
  func.func @transform_0(%arg0: i32) -> i32 {
    %c0_i32 = arith.constant 0 : i32
    %c0_i32_0 = arith.constant 0 : i32
    return %c0_i32 : i32
  }
  func.func @transform_1(%arg0: i32) -> (i32, i32) {
    %c0_i32 = arith.constant 0 : i32
    %c0_i32_0 = arith.constant 0 : i32
    %c0_i32_1 = arith.constant 0 : i32
    return %c0_i32, %c0_i32_0 : i32, i32
  }
  func.func @transform_2(%arg0: i32) -> (i32, i32) {
    %c0_i32 = arith.constant 0 : i32
    %c0_i32_0 = arith.constant 0 : i32
    %c0_i32_1 = arith.constant 0 : i32
    return %c0_i32, %c0_i32_0 : i32, i32
  }
  func.func @transform_3(%arg0: i32) -> (i32, i32) {
    %c0_i32 = arith.constant 0 : i32
    %c0_i32_0 = arith.constant 0 : i32
    %c0_i32_1 = arith.constant 0 : i32
    return %c0_i32, %c0_i32_0 : i32, i32
  }
  func.func @transform_4(%arg0: i32) -> (i32, i32) {
    %c0_i32 = arith.constant 0 : i32
    %c0_i32_0 = arith.constant 0 : i32
    return %c0_i32, %arg0 : i32, i32
  }
  func.func @transform_5(%arg0: i32) -> (i32, i32) {
    %c0_i32 = arith.constant 0 : i32
    %c0_i32_0 = arith.constant 0 : i32
    return %c0_i32, %arg0 : i32, i32
  }
}

module attributes {stable_mosaic.version = 11 : i64} {
  func.func @einfft_kernel(%arg0: i32, %arg1: memref<2xf32, #tpu.memory_space<smem>>, %arg2: memref<16x16xf32, #tpu.memory_space<vmem>>, %arg3: memref<16x16xf32, #tpu.memory_space<vmem>>, %arg4: memref<16x16xf32, #tpu.memory_space<vmem>>, %arg5: memref<16x128xf32, #tpu.memory_space<vmem>>, %arg6: memref<16x128xf32, #tpu.memory_space<vmem>>) attributes {dimension_semantics = [#tpu.dimension_semantics<parallel>], iteration_bounds = array<i64: 1>, scalar_prefetch = 0 : i64, scratch_operands = 0 : i64, tpu.core_type = #tpu.core_type<tc>, window_params = [{transform_indices = @transform_0, window_bounds = array<i64: 2>}, {pipeline_mode = #tpu.pipeline_mode<synchronous>, transform_indices = @transform_1, window_bounds = array<i64: 16, 16>}, {pipeline_mode = #tpu.pipeline_mode<synchronous>, transform_indices = @transform_2, window_bounds = array<i64: 16, 16>}, {pipeline_mode = #tpu.pipeline_mode<synchronous>, transform_indices = @transform_3, window_bounds = array<i64: 16, 16>}, {transform_indices = @transform_4, window_bounds = array<i64: 16, 128>}, {transform_indices = @transform_5, window_bounds = array<i64: 16, 128>}]} {
    %c0 = arith.constant 0 : index
    %0 = memref.load %arg1[%c0] : memref<2xf32, #tpu.memory_space<smem>>
    %c1 = arith.constant 1 : index
    %1 = memref.load %arg1[%c1] : memref<2xf32, #tpu.memory_space<smem>>
    %c0_0 = arith.constant 0 : index
    %c0_1 = arith.constant 0 : index
    %2 = vector.load %arg2[%c0_0, %c0_1] : memref<16x16xf32, #tpu.memory_space<vmem>>, vector<16x16xf32>
    %c0_2 = arith.constant 0 : index
    %c0_3 = arith.constant 0 : index
    %3 = vector.load %arg5[%c0_2, %c0_3] : memref<16x128xf32, #tpu.memory_space<vmem>>, vector<16x128xf32>
    %cst = arith.constant dense<0.000000e+00> : vector<16x128xf32>
    %4 = tpu.matmul %2, %3, %cst {dimension_numbers = #tpu.dot_dimension_numbers<[1], [0], [0], [1], [0, 0, 1, 1], [], []>} : vector<16x16xf32>, vector<16x128xf32>, vector<16x128xf32> -> vector<16x128xf32>
    %5 = vector.broadcast %0 : f32 to vector<16x128xf32>
    %6 = arith.mulf %4, %5 : vector<16x128xf32>
    %7 = math.absf %6 : vector<16x128xf32>
    %cst_4 = arith.constant 0.000000e+00 : f32
    %8 = vector.broadcast %cst_4 : f32 to vector<16x128xf32>
    %9 = arith.subf %8, %7 : vector<16x128xf32>
    %10 = math.exp %9 : vector<16x128xf32>
    %cst_5 = arith.constant 1.000000e+00 : f32
    %11 = vector.broadcast %cst_5 : f32 to vector<16x128xf32>
    %12 = arith.addf %11, %10 : vector<16x128xf32>
    %13 = tpu.reciprocal %12 {approx = true} : vector<16x128xf32> -> vector<16x128xf32>
    %cst_6 = arith.constant 0.000000e+00 : f32
    %14 = vector.broadcast %cst_6 : f32 to vector<16x128xf32>
    %15 = arith.cmpf oge, %6, %14 : vector<16x128xf32>
    %cst_7 = arith.constant 1.000000e+00 : f32
    %16 = vector.broadcast %cst_7 : f32 to vector<16x128xf32>
    %17 = arith.subf %16, %13 : vector<16x128xf32>
    %18 = arith.select %15, %13, %17 : vector<16x128xi1>, vector<16x128xf32>
    %19 = arith.mulf %6, %18 : vector<16x128xf32>
    %20 = vector.broadcast %1 : f32 to vector<16x128xf32>
    %21 = arith.mulf %4, %20 : vector<16x128xf32>
    %22 = math.absf %21 : vector<16x128xf32>
    %cst_8 = arith.constant 0.000000e+00 : f32
    %23 = vector.broadcast %cst_8 : f32 to vector<16x128xf32>
    %24 = arith.subf %23, %22 : vector<16x128xf32>
    %25 = math.exp %24 : vector<16x128xf32>
    %cst_9 = arith.constant 1.000000e+00 : f32
    %26 = vector.broadcast %cst_9 : f32 to vector<16x128xf32>
    %27 = arith.addf %26, %25 : vector<16x128xf32>
    %28 = tpu.reciprocal %27 {approx = true} : vector<16x128xf32> -> vector<16x128xf32>
    %cst_10 = arith.constant 0.000000e+00 : f32
    %29 = vector.broadcast %cst_10 : f32 to vector<16x128xf32>
    %30 = arith.cmpf oge, %21, %29 : vector<16x128xf32>
    %cst_11 = arith.constant 1.000000e+00 : f32
    %31 = vector.broadcast %cst_11 : f32 to vector<16x128xf32>
    %32 = arith.subf %31, %28 : vector<16x128xf32>
    %33 = arith.select %30, %28, %32 : vector<16x128xi1>, vector<16x128xf32>
    %34 = arith.mulf %21, %33 : vector<16x128xf32>
    %c0_12 = arith.constant 0 : index
    %c0_13 = arith.constant 0 : index
    %35 = vector.load %arg3[%c0_12, %c0_13] : memref<16x16xf32, #tpu.memory_space<vmem>>, vector<16x16xf32>
    %cst_14 = arith.constant dense<0.000000e+00> : vector<16x128xf32>
    %36 = tpu.matmul %35, %19, %cst_14 {dimension_numbers = #tpu.dot_dimension_numbers<[1], [0], [0], [1], [0, 0, 1, 1], [], []>} : vector<16x16xf32>, vector<16x128xf32>, vector<16x128xf32> -> vector<16x128xf32>
    %c0_15 = arith.constant 0 : index
    %c0_16 = arith.constant 0 : index
    %37 = vector.load %arg4[%c0_15, %c0_16] : memref<16x16xf32, #tpu.memory_space<vmem>>, vector<16x16xf32>
    %cst_17 = arith.constant dense<0.000000e+00> : vector<16x128xf32>
    %38 = tpu.matmul %37, %34, %cst_17 {dimension_numbers = #tpu.dot_dimension_numbers<[1], [0], [0], [1], [0, 0, 1, 1], [], []>} : vector<16x16xf32>, vector<16x128xf32>, vector<16x128xf32> -> vector<16x128xf32>
    %39 = arith.addf %36, %38 : vector<16x128xf32>
    %c0_18 = arith.constant 0 : index
    %c0_19 = arith.constant 0 : index
    %40 = vector.load %arg6[%c0_18, %c0_19] : memref<16x128xf32, #tpu.memory_space<vmem>>, vector<16x128xf32>
    tpu.vector_store %arg6[%c0_18, %c0_19], %39 {strides = array<i32>} : memref<16x128xf32, #tpu.memory_space<vmem>>, vector<16x128xf32>,
    return
  }
  func.func @transform_0(%arg0: i32) -> i32 {
    %c0_i32 = arith.constant 0 : i32
    %c0_i32_0 = arith.constant 0 : i32
    return %c0_i32 : i32
  }
  func.func @transform_1(%arg0: i32) -> (i32, i32) {
    %c0_i32 = arith.constant 0 : i32
    %c0_i32_0 = arith.constant 0 : i32
    %c0_i32_1 = arith.constant 0 : i32
    return %c0_i32, %c0_i32_0 : i32, i32
  }
  func.func @transform_2(%arg0: i32) -> (i32, i32) {
    %c0_i32 = arith.constant 0 : i32
    %c0_i32_0 = arith.constant 0 : i32
    %c0_i32_1 = arith.constant 0 : i32
    return %c0_i32, %c0_i32_0 : i32, i32
  }
  func.func @transform_3(%arg0: i32) -> (i32, i32) {
    %c0_i32 = arith.constant 0 : i32
    %c0_i32_0 = arith.constant 0 : i32
    %c0_i32_1 = arith.constant 0 : i32
    return %c0_i32, %c0_i32_0 : i32, i32
  }
  func.func @transform_4(%arg0: i32) -> (i32, i32) {
    %c0_i32 = arith.constant 0 : i32
    %c0_i32_0 = arith.constant 0 : i32
    return %c0_i32, %arg0 : i32, i32
  }
  func.func @transform_5(%arg0: i32) -> (i32, i32) {
    %c0_i32 = arith.constant 0 : i32
    %c0_i32_0 = arith.constant 0 : i32
    return %c0_i32, %arg0 : i32, i32
  }
}

</mosaic_0001>

<llo_original>
// kernel: tpu_custom_call.1
$region0: #{tpu_custom_call.1}
  #allocation0 [shape = 'u32[]', space=smem, size = 0x4, offset = 0x4, fixed_abs, tag = 'smem constant byte address 0x4 - core index']
  #allocation1 [shape = 'u32[72,128]{1,0:T(1,128)}', space=vmem, size = 0x9000, scoped, tag = 'internal scratch']
  %s0 = inlined_call_operand.hbm [shape: f32[2], index: 0, kind: input, shape index: {}]
  %s1 = inlined_call_operand.hbm [shape: f32[16,16], index: 1, kind: input, shape index: {}]
  %s2 = inlined_call_operand.hbm [shape: f32[16,16], index: 2, kind: input, shape index: {}]
  %s3 = inlined_call_operand.hbm [shape: f32[16,16], index: 3, kind: input, shape index: {}]
  %s4 = inlined_call_operand.hbm [shape: f32[16,128], index: 4, kind: input, shape index: {}]
  %s5 = inlined_call_operand.hbm [shape: f32[16,128], index: 5, kind: output, shape index: {}]
  %s6 = sld [smem:[#allocation0]]
  $region50: #{tpu_custom_call.1} parent=0
    _
  %s8 = ssub.s32 1, %s6
  %s9 = scalar_select 0, %s8, %s6
  $region1: #{tpu_custom_call.1} parent=0
    #allocation2 [shape = 'u8[512]{0}', space=smem, size = 0x200, scoped, tag = 'input window, operand 0, single buffered']
    #allocation3 [shape = 's32[1]{0}', space=sflag, size = 0x4, scoped, tag = 'scoped memory for tpu_custom_call.1']
    #allocation4 [shape = 's32[1]{0}', space=sflag, size = 0x4, scoped, tag = 'scoped memory for tpu_custom_call.1']
    #allocation5 [shape = 's32[1]{0}', space=sflag, size = 0x4, scoped, tag = 'scoped memory for tpu_custom_call.1']
    #allocation6 [shape = 'u8[8192]{0}', space=vmem, size = 0x2000, scoped, tag = 'input window, operand 1, single buffered']
    #allocation7 [shape = 'u8[8192]{0}', space=vmem, size = 0x2000, scoped, tag = 'input window, operand 2, single buffered']
    #allocation8 [shape = 's32[1]{0}', space=sflag, size = 0x4, scoped, tag = 'scoped memory for tpu_custom_call.1']
    #allocation9 [shape = 'u8[8192]{0}', space=vmem, size = 0x2000, scoped, tag = 'input window, operand 3, single buffered']
    #allocation10 [shape = 'u8[8192]{0}', space=vmem, size = 0x2000, scoped, tag = 'input window, operand 4, single buffered']
    #allocation11 [shape = 's32[1]{0}', space=sflag, size = 0x4, scoped, tag = 'scoped memory for tpu_custom_call.1']
    #allocation12 [shape = 'u8[8192]{0}', space=vmem, size = 0x2000, scoped, tag = 'output window, operand 0, single buffered']
    %10 = vsyncpa [#allocation5], 0
    %11 = vsyncpa [#allocation3], 0
    %12 = vsyncpa [#allocation8], 0
    %13 = vsyncpa [#allocation11], 0
    %14 = vsyncpa [#allocation4], 0
    // Predicated region
    $region2: #{tpu_custom_call.1} parent=1 // pred_check
      _
    $region3: #{tpu_custom_call.1} parent=1 // pred_check_branch
      %16 = sbr.rel (0) target = $region5
    $region4: #{tpu_custom_call.1} parent=1 // pred_region
      %18 = vsyncadd [#allocation5], 0
      %s20 = sshll.u32 %s0, 4
      %s21 = int_to_ptr.hbm [resolvable:$true] %s20
      %23 = dma.hbm_to_smem %s21, 16, [#allocation2], [#allocation5]
    $region5: #{tpu_custom_call.1} parent=1 // pred_fallthru
      _
    // Predicated region
    $region6: #{tpu_custom_call.1} parent=1 // pred_check
      _
    $region7: #{tpu_custom_call.1} parent=1 // pred_check_branch
      %25 = sbr.rel (0) target = $region9
    $region8: #{tpu_custom_call.1} parent=1 // pred_region
      %27 = vsyncadd [#allocation3], 0
      %s28 = sshll.u32 %s1, 4
      %s29 = int_to_ptr.hbm [resolvable:$true] %s28
      %s30 = sshll.u32 [#allocation6], 4
      %s31 = int_to_ptr.vmem [resolvable:$true] %s30
      %36 = dma.hbm_to_vmem [thread:$0]  %s29, 256, %s31, [#allocation3], 128, 128, 8
    $region9: #{tpu_custom_call.1} parent=1 // pred_fallthru
      _
    // Predicated region
    $region10: #{tpu_custom_call.1} parent=1 // pred_check
      _
    $region11: #{tpu_custom_call.1} parent=1 // pred_check_branch
      %38 = sbr.rel (0) target = $region13
    $region12: #{tpu_custom_call.1} parent=1 // pred_region
      %40 = vsyncadd [#allocation8], 0
      %s41 = sshll.u32 %s2, 4
      %s42 = int_to_ptr.hbm [resolvable:$true] %s41
      %s43 = sshll.u32 [#allocation7], 4
      %s44 = int_to_ptr.vmem [resolvable:$true] %s43
      %49 = dma.hbm_to_vmem [thread:$0]  %s42, 256, %s44, [#allocation8], 128, 128, 8
    $region13: #{tpu_custom_call.1} parent=1 // pred_fallthru
      _
    // Predicated region
    $region14: #{tpu_custom_call.1} parent=1 // pred_check
      _
    $region15: #{tpu_custom_call.1} parent=1 // pred_check_branch
      %51 = sbr.rel (0) target = $region17
    $region16: #{tpu_custom_call.1} parent=1 // pred_region
      %53 = vsyncadd [#allocation8], 0
      %s54 = sshll.u32 %s3, 4
      %s55 = int_to_ptr.hbm [resolvable:$true] %s54
      %s56 = sshll.u32 [#allocation9], 4
      %s57 = int_to_ptr.vmem [resolvable:$true] %s56
      %62 = dma.hbm_to_vmem [thread:$0]  %s55, 256, %s57, [#allocation8], 128, 128, 8
    $region17: #{tpu_custom_call.1} parent=1 // pred_fallthru
      _
    // Predicated region
    $region18: #{tpu_custom_call.1} parent=1 // pred_check
      _
    $region19: #{tpu_custom_call.1} parent=1 // pred_check_branch
      %64 = sbr.rel (0) target = $region21
    $region20: #{tpu_custom_call.1} parent=1 // pred_region
      %66 = vsyncadd [#allocation11], 0
      %s67 = sshll.u32 %s4, 4
      %s68 = int_to_ptr.hbm [resolvable:$true] %s67
      %s69 = sshll.u32 [#allocation10], 4
      %s70 = int_to_ptr.vmem [resolvable:$true] %s69
      %75 = dma.hbm_to_vmem [thread:$0]  %s68, 256, %s70, [#allocation11], 128, 128, 8
    $region21: #{tpu_custom_call.1} parent=1 // pred_fallthru
      _
    // Predicated region
    $region22: #{tpu_custom_call.1} parent=1 // pred_check
      _
    $region23: #{tpu_custom_call.1} parent=1 // pred_check_branch
      %77 = sbr.rel (0) target = $region25
    $region24: #{tpu_custom_call.1} parent=1 // pred_region
      %79 = dma.done [#allocation5], 16
    $region25: #{tpu_custom_call.1} parent=1 // pred_fallthru
      _
    // Predicated region
    $region26: #{tpu_custom_call.1} parent=1 // pred_check
      _
    $region27: #{tpu_custom_call.1} parent=1 // pred_check_branch
      %81 = sbr.rel (0) target = $region29
    $region28: #{tpu_custom_call.1} parent=1 // pred_region
      %83 = dma.done [#allocation3], 256
    $region29: #{tpu_custom_call.1} parent=1 // pred_fallthru
      _
    // Predicated region
    $region30: #{tpu_custom_call.1} parent=1 // pred_check
      _
    $region31: #{tpu_custom_call.1} parent=1 // pred_check_branch
      %85 = sbr.rel (0) target = $region33
    $region32: #{tpu_custom_call.1} parent=1 // pred_region
      %87 = dma.done [#allocation8], 256
    $region33: #{tpu_custom_call.1} parent=1 // pred_fallthru
      _
    // Predicated region
    $region34: #{tpu_custom_call.1} parent=1 // pred_check
      _
    $region35: #{tpu_custom_call.1} parent=1 // pred_check_branch
      %89 = sbr.rel (0) target = $region37
    $region36: #{tpu_custom_call.1} parent=1 // pred_region
      %91 = dma.done [#allocation8], 256
    $region37: #{tpu_custom_call.1} parent=1 // pred_fallthru
      _
    // Predicated region
    $region38: #{tpu_custom_call.1} parent=1 // pred_check
      _
    $region39: #{tpu_custom_call.1} parent=1 // pred_check_branch
      %93 = sbr.rel (0) target = $region41
    $region40: #{tpu_custom_call.1} parent=1 // pred_region
      %95 = dma.done [#allocation11], 256
    $region41: #{tpu_custom_call.1} parent=1 // pred_fallthru
      _
    %96 = sfence
    %s97 = sld [smem:[#allocation2]]
    %s98 = sld [smem:[#allocation2 + $0x1]]
    %v99 = vld [vmem:[#allocation6] sm:$0xff]
    %v100 = vld [vmem:[#allocation6 + $0x8] sm:$0xff]
    %v101 = vld [vmem:[#allocation10] sm:$0xff]
    %v102 = vld [vmem:[#allocation10 + $0x8] sm:$0xff]
    %vm103 = vcmask 130048
    %v105 = vsel %vm103, %v99, 0
    %v108 = vsel %vm103, %v100, 0
    %110 = vmatpush.msra.mxu0 0.0
    %111 = vmatpush.msra.mxu0 0.0
    %112 = vmatpush.msra.mxu0 0.0
    %113 = vmatpush.msra.mxu0 0.0
    %114 = vmatpush.msra.mxu0 0.0
    %115 = vmatpush.msra.mxu0 0.0
    %116 = vmatpush.msra.mxu0 0.0
    %117 = vmatpush.msra.mxu0 0.0
    %118 = vmatpush.msra.mxu0 0.0
    %119 = vmatpush.msra.mxu0 0.0
    %120 = vmatpush.msra.mxu0 0.0
    %121 = vmatpush.msra.mxu0 0.0
    %122 = vmatpush.msra.mxu0 0.0
    %123 = vmatpush.msra.mxu0 0.0
    %124 = vmatpush.msra.mxu0 %v102
    %125 = vmatpush.msra.mxu0 %v101
    %126 = vmatmul.f32.gmra.mxu0 %v105
    %v127 = vpop.f32.mrf.mxu0
    %v128 = vadd.f32 0.0, %v127
    %129 = vmatmul.f32.gmra.mxu0 %v108
    %v130 = vpop.f32.mrf.mxu0
    %v131 = vadd.f32 0.0, %v130
    %132 = vdwg.mxu0
    %v133 = vstv %s97
    %v134 = vmul.f32 %v128, %v133
    %v135 = vmul.f32 %v131, %v133
    %v136 = vand.u32 2147483647, %v134
    %v137 = vand.u32 2147483647, %v135
    %v138 = vsub.f32 0.0, %v136
    %v139 = vsub.f32 0.0, %v137
    %v140 = vmul.f32 %v138, 1.442695
    %v141 = vpow.pop %v140
    %v142 = vmul.f32 %v139, 1.442695
    %v143 = vpow.pop %v142
    %v144 = vadd.f32 %v141, 1.0
    %v145 = vadd.f32 %v143, 1.0
    %v146 = vrcp.pop %v144
    %v147 = vrcp.pop %v145
    %vm148 = vcmp.ge.f32.partialorder %v134, 0.0
    %vm149 = vcmp.ge.f32.partialorder %v135, 0.0
    %v150 = vsub.f32 1.0, %v146
    %v151 = vsub.f32 1.0, %v147
    %v152 = vsel %vm148, %v146, %v150
    %v153 = vsel %vm149, %v147, %v151
    %v154 = vmul.f32 %v134, %v152
    %v155 = vmul.f32 %v135, %v153
    %v156 = vstv %s98
    %v157 = vmul.f32 %v128, %v156
    %v158 = vmul.f32 %v131, %v156
    %v159 = vand.u32 2147483647, %v157
    %v160 = vand.u32 2147483647, %v158
    %v161 = vsub.f32 0.0, %v159
    %v162 = vsub.f32 0.0, %v160
    %v163 = vmul.f32 %v161, 1.442695
    %v164 = vpow.pop %v163
    %v165 = vmul.f32 %v162, 1.442695
    %v166 = vpow.pop %v165
    %v167 = vadd.f32 %v164, 1.0
    %v168 = vadd.f32 %v166, 1.0
    %v169 = vrcp.pop %v167
    %v170 = vrcp.pop %v168
    %vm171 = vcmp.ge.f32.partialorder %v157, 0.0
    %vm172 = vcmp.ge.f32.partialorder %v158, 0.0
    %v173 = vsub.f32 1.0, %v169
    %v174 = vsub.f32 1.0, %v170
    %v175 = vsel %vm171, %v169, %v173
    %v176 = vsel %vm172, %v170, %v174
    %v177 = vmul.f32 %v157, %v175
    %v178 = vmul.f32 %v158, %v176
    %v179 = vld [vmem:[#allocation7] sm:$0xff]
    %v180 = vld [vmem:[#allocation7 + $0x8] sm:$0xff]
    %v181 = vld [vmem:[#allocation9] sm:$0xff]
    %v182 = vld [vmem:[#allocation9 + $0x8] sm:$0xff]
    %v184 = vsel %vm103, %v181, 0
    %v187 = vsel %vm103, %v182, 0
    %189 = vmatpush.msra.mxu0 0.0
    %190 = vmatpush.msra.mxu0 0.0
    %191 = vmatpush.msra.mxu0 0.0
    %192 = vmatpush.msra.mxu0 0.0
    %193 = vmatpush.msra.mxu0 0.0
    %194 = vmatpush.msra.mxu0 0.0
    %195 = vmatpush.msra.mxu0 0.0
    %196 = vmatpush.msra.mxu0 0.0
    %197 = vmatpush.msra.mxu0 0.0
    %198 = vmatpush.msra.mxu0 0.0
    %199 = vmatpush.msra.mxu0 0.0
    %200 = vmatpush.msra.mxu0 0.0
    %201 = vmatpush.msra.mxu0 0.0
    %202 = vmatpush.msra.mxu0 0.0
    %203 = vmatpush.msra.mxu0 %v178
    %204 = vmatpush.msra.mxu0 %v177
    %205 = vmatmul.f32.gmra.mxu0 %v184
    %v206 = vpop.f32.mrf.mxu0
    %v207 = vadd.f32 0.0, %v206
    %208 = vmatmul.f32.gmra.mxu0 %v187
    %v209 = vpop.f32.mrf.mxu0
    %v210 = vadd.f32 0.0, %v209
    %211 = vdwg.mxu0
    %v213 = vsel %vm103, %v179, 0
    %v216 = vsel %vm103, %v180, 0
    %218 = vmatpush.msra.mxu0 0.0
    %219 = vmatpush.msra.mxu0 0.0
    %220 = vmatpush.msra.mxu0 0.0
    %221 = vmatpush.msra.mxu0 0.0
    %222 = vmatpush.msra.mxu0 0.0
    %223 = vmatpush.msra.mxu0 0.0
    %224 = vmatpush.msra.mxu0 0.0
    %225 = vmatpush.msra.mxu0 0.0
    %226 = vmatpush.msra.mxu0 0.0
    %227 = vmatpush.msra.mxu0 0.0
    %228 = vmatpush.msra.mxu0 0.0
    %229 = vmatpush.msra.mxu0 0.0
    %230 = vmatpush.msra.mxu0 0.0
    %231 = vmatpush.msra.mxu0 0.0
    %232 = vmatpush.msra.mxu0 %v155
    %233 = vmatpush.msra.mxu0 %v154
    %234 = vmatmul.f32.gmra.mxu0 %v213
    %v235 = vpop.f32.mrf.mxu0
    %v236 = vadd.f32 %v207, %v235
    %237 = vmatmul.f32.gmra.mxu0 %v216
    %v238 = vpop.f32.mrf.mxu0
    %v239 = vadd.f32 %v210, %v238
    %240 = vdwg.mxu0
    %241 = vst [vmem:[#allocation12] sm:$0xff] %v236
    %242 = vst [vmem:[#allocation12 + $0x8] sm:$0xff] %v239
    // Predicated region
    $region42: #{tpu_custom_call.1} parent=1 // pred_check
      _
    $region43: #{tpu_custom_call.1} parent=1 // pred_check_branch
      %244 = sbr.rel (0) target = $region45
    $region44: #{tpu_custom_call.1} parent=1 // pred_region
      %246 = vsyncadd [#allocation4], 0
      %s247 = sshll.u32 [#allocation12], 4
      %s248 = int_to_ptr.vmem [resolvable:$true] %s247
      %s249 = sshll.u32 %s5, 4
      %s250 = int_to_ptr.hbm [resolvable:$true] %s249
      %255 = dma.vmem_to_hbm [thread:$0]  %s248, 256, %s250, [#allocation4], 128, 128, 8
    $region45: #{tpu_custom_call.1} parent=1 // pred_fallthru
      _
    // Predicated region
    $region46: #{tpu_custom_call.1} parent=1 // pred_check
      _
    $region47: #{tpu_custom_call.1} parent=1 // pred_check_branch
      %257 = sbr.rel (0) target = $region49
    $region48: #{tpu_custom_call.1} parent=1 // pred_region
      %259 = dma.done [#allocation4], 256
    $region49: #{tpu_custom_call.1} parent=1 // pred_fallthru
      _
    %260 = vsyncpa [#allocation3], 1
    %261 = vsyncpa [#allocation8], 1
    %262 = vsyncpa [#allocation11], 1
    %263 = vsyncpa [#allocation4], 1
    %264 = vsyncpa [#allocation5], 1

// kernel: tpu_custom_call.1
$region0: #{tpu_custom_call.1}
  #allocation0 [shape = 'u32[]', space=smem, size = 0x4, offset = 0x4, fixed_abs, tag = 'smem constant byte address 0x4 - core index']
  #allocation1 [shape = 'u32[72,128]{1,0:T(1,128)}', space=vmem, size = 0x9000, scoped, tag = 'internal scratch']
  %s0 = inlined_call_operand.hbm [shape: f32[2], index: 0, kind: input, shape index: {}]
  %s1 = inlined_call_operand.hbm [shape: f32[16,16], index: 1, kind: input, shape index: {}]
  %s2 = inlined_call_operand.hbm [shape: f32[16,16], index: 2, kind: input, shape index: {}]
  %s3 = inlined_call_operand.hbm [shape: f32[16,16], index: 3, kind: input, shape index: {}]
  %s4 = inlined_call_operand.hbm [shape: f32[16,128], index: 4, kind: input, shape index: {}]
  %s5 = inlined_call_operand.hbm [shape: f32[16,128], index: 5, kind: output, shape index: {}]
  %s6 = sld [smem:[#allocation0]]
  $region50: #{tpu_custom_call.1} parent=0
    _
  %s8 = ssub.s32 1, %s6
  %s9 = scalar_select 0, %s8, %s6
  $region1: #{tpu_custom_call.1} parent=0
    #allocation2 [shape = 'u8[512]{0}', space=smem, size = 0x200, scoped, tag = 'input window, operand 0, single buffered']
    #allocation3 [shape = 's32[1]{0}', space=sflag, size = 0x4, scoped, tag = 'scoped memory for tpu_custom_call.1']
    #allocation4 [shape = 's32[1]{0}', space=sflag, size = 0x4, scoped, tag = 'scoped memory for tpu_custom_call.1']
    #allocation5 [shape = 's32[1]{0}', space=sflag, size = 0x4, scoped, tag = 'scoped memory for tpu_custom_call.1']
    #allocation6 [shape = 'u8[8192]{0}', space=vmem, size = 0x2000, scoped, tag = 'input window, operand 1, single buffered']
    #allocation7 [shape = 'u8[8192]{0}', space=vmem, size = 0x2000, scoped, tag = 'input window, operand 2, single buffered']
    #allocation8 [shape = 's32[1]{0}', space=sflag, size = 0x4, scoped, tag = 'scoped memory for tpu_custom_call.1']
    #allocation9 [shape = 'u8[8192]{0}', space=vmem, size = 0x2000, scoped, tag = 'input window, operand 3, single buffered']
    #allocation10 [shape = 'u8[8192]{0}', space=vmem, size = 0x2000, scoped, tag = 'input window, operand 4, single buffered']
    #allocation11 [shape = 's32[1]{0}', space=sflag, size = 0x4, scoped, tag = 'scoped memory for tpu_custom_call.1']
    #allocation12 [shape = 'u8[8192]{0}', space=vmem, size = 0x2000, scoped, tag = 'output window, operand 0, single buffered']
    %10 = vsyncpa [#allocation5], 0
    %11 = vsyncpa [#allocation3], 0
    %12 = vsyncpa [#allocation8], 0
    %13 = vsyncpa [#allocation11], 0
    %14 = vsyncpa [#allocation4], 0
    // Predicated region
    $region2: #{tpu_custom_call.1} parent=1 // pred_check
      _
    $region3: #{tpu_custom_call.1} parent=1 // pred_check_branch
      %16 = sbr.rel (0) target = $region5
    $region4: #{tpu_custom_call.1} parent=1 // pred_region
      %18 = vsyncadd [#allocation5], 0
      %s20 = sshll.u32 %s0, 4
      %s21 = int_to_ptr.hbm [resolvable:$true] %s20
      %23 = dma.hbm_to_smem %s21, 16, [#allocation2], [#allocation5]
    $region5: #{tpu_custom_call.1} parent=1 // pred_fallthru
      _
    // Predicated region
    $region6: #{tpu_custom_call.1} parent=1 // pred_check
      _
    $region7: #{tpu_custom_call.1} parent=1 // pred_check_branch
      %25 = sbr.rel (0) target = $region9
    $region8: #{tpu_custom_call.1} parent=1 // pred_region
      %27 = vsyncadd [#allocation3], 0
      %s28 = sshll.u32 %s1, 4
      %s29 = int_to_ptr.hbm [resolvable:$true] %s28
      %s30 = sshll.u32 [#allocation6], 4
      %s31 = int_to_ptr.vmem [resolvable:$true] %s30
      %36 = dma.hbm_to_vmem [thread:$0]  %s29, 256, %s31, [#allocation3], 128, 128, 8
    $region9: #{tpu_custom_call.1} parent=1 // pred_fallthru
      _
    // Predicated region
    $region10: #{tpu_custom_call.1} parent=1 // pred_check
      _
    $region11: #{tpu_custom_call.1} parent=1 // pred_check_branch
      %38 = sbr.rel (0) target = $region13
    $region12: #{tpu_custom_call.1} parent=1 // pred_region
      %40 = vsyncadd [#allocation8], 0
      %s41 = sshll.u32 %s2, 4
      %s42 = int_to_ptr.hbm [resolvable:$true] %s41
      %s43 = sshll.u32 [#allocation7], 4
      %s44 = int_to_ptr.vmem [resolvable:$true] %s43
      %49 = dma.hbm_to_vmem [thread:$0]  %s42, 256, %s44, [#allocation8], 128, 128, 8
    $region13: #{tpu_custom_call.1} parent=1 // pred_fallthru
      _
    // Predicated region
    $region14: #{tpu_custom_call.1} parent=1 // pred_check
      _
    $region15: #{tpu_custom_call.1} parent=1 // pred_check_branch
      %51 = sbr.rel (0) target = $region17
    $region16: #{tpu_custom_call.1} parent=1 // pred_region
      %53 = vsyncadd [#allocation8], 0
      %s54 = sshll.u32 %s3, 4
      %s55 = int_to_ptr.hbm [resolvable:$true] %s54
      %s56 = sshll.u32 [#allocation9], 4
      %s57 = int_to_ptr.vmem [resolvable:$true] %s56
      %62 = dma.hbm_to_vmem [thread:$0]  %s55, 256, %s57, [#allocation8], 128, 128, 8
    $region17: #{tpu_custom_call.1} parent=1 // pred_fallthru
      _
    // Predicated region
    $region18: #{tpu_custom_call.1} parent=1 // pred_check
      _
    $region19: #{tpu_custom_call.1} parent=1 // pred_check_branch
      %64 = sbr.rel (0) target = $region21
    $region20: #{tpu_custom_call.1} parent=1 // pred_region
      %66 = vsyncadd [#allocation11], 0
      %s67 = sshll.u32 %s4, 4
      %s68 = int_to_ptr.hbm [resolvable:$true] %s67
      %s69 = sshll.u32 [#allocation10], 4
      %s70 = int_to_ptr.vmem [resolvable:$true] %s69
      %75 = dma.hbm_to_vmem [thread:$0]  %s68, 256, %s70, [#allocation11], 128, 128, 8
    $region21: #{tpu_custom_call.1} parent=1 // pred_fallthru
      _
    // Predicated region
    $region22: #{tpu_custom_call.1} parent=1 // pred_check
      _
    $region23: #{tpu_custom_call.1} parent=1 // pred_check_branch
      %77 = sbr.rel (0) target = $region25
    $region24: #{tpu_custom_call.1} parent=1 // pred_region
      %79 = dma.done [#allocation5], 16
    $region25: #{tpu_custom_call.1} parent=1 // pred_fallthru
      _
    // Predicated region
    $region26: #{tpu_custom_call.1} parent=1 // pred_check
      _
    $region27: #{tpu_custom_call.1} parent=1 // pred_check_branch
      %81 = sbr.rel (0) target = $region29
    $region28: #{tpu_custom_call.1} parent=1 // pred_region
      %83 = dma.done [#allocation3], 256
    $region29: #{tpu_custom_call.1} parent=1 // pred_fallthru
      _
    // Predicated region
    $region30: #{tpu_custom_call.1} parent=1 // pred_check
      _
    $region31: #{tpu_custom_call.1} parent=1 // pred_check_branch
      %85 = sbr.rel (0) target = $region33
    $region32: #{tpu_custom_call.1} parent=1 // pred_region
      %87 = dma.done [#allocation8], 256
    $region33: #{tpu_custom_call.1} parent=1 // pred_fallthru
      _
    // Predicated region
    $region34: #{tpu_custom_call.1} parent=1 // pred_check
      _
    $region35: #{tpu_custom_call.1} parent=1 // pred_check_branch
      %89 = sbr.rel (0) target = $region37
    $region36: #{tpu_custom_call.1} parent=1 // pred_region
      %91 = dma.done [#allocation8], 256
    $region37: #{tpu_custom_call.1} parent=1 // pred_fallthru
      _
    // Predicated region
    $region38: #{tpu_custom_call.1} parent=1 // pred_check
      _
    $region39: #{tpu_custom_call.1} parent=1 // pred_check_branch
      %93 = sbr.rel (0) target = $region41
    $region40: #{tpu_custom_call.1} parent=1 // pred_region
      %95 = dma.done [#allocation11], 256
    $region41: #{tpu_custom_call.1} parent=1 // pred_fallthru
      _
    %96 = sfence
    %s97 = sld [smem:[#allocation2]]
    %s98 = sld [smem:[#allocation2 + $0x1]]
    %v99 = vld [vmem:[#allocation6] sm:$0xff]
    %v100 = vld [vmem:[#allocation6 + $0x8] sm:$0xff]
    %v101 = vld [vmem:[#allocation10] sm:$0xff]
    %v102 = vld [vmem:[#allocation10 + $0x8] sm:$0xff]
    %vm103 = vcmask 130048
    %v105 = vsel %vm103, %v99, 0
    %v108 = vsel %vm103, %v100, 0
    %110 = vmatpush.msra.mxu0 0.0
    %111 = vmatpush.msra.mxu0 0.0
    %112 = vmatpush.msra.mxu0 0.0
    %113 = vmatpush.msra.mxu0 0.0
    %114 = vmatpush.msra.mxu0 0.0
    %115 = vmatpush.msra.mxu0 0.0
    %116 = vmatpush.msra.mxu0 0.0
    %117 = vmatpush.msra.mxu0 0.0
    %118 = vmatpush.msra.mxu0 0.0
    %119 = vmatpush.msra.mxu0 0.0
    %120 = vmatpush.msra.mxu0 0.0
    %121 = vmatpush.msra.mxu0 0.0
    %122 = vmatpush.msra.mxu0 0.0
    %123 = vmatpush.msra.mxu0 0.0
    %124 = vmatpush.msra.mxu0 %v102
    %125 = vmatpush.msra.mxu0 %v101
    %126 = vmatmul.f32.gmra.mxu0 %v105
    %v127 = vpop.f32.mrf.mxu0
    %v128 = vadd.f32 0.0, %v127
    %129 = vmatmul.f32.gmra.mxu0 %v108
    %v130 = vpop.f32.mrf.mxu0
    %v131 = vadd.f32 0.0, %v130
    %132 = vdwg.mxu0
    %v133 = vstv %s97
    %v134 = vmul.f32 %v128, %v133
    %v135 = vmul.f32 %v131, %v133
    %v136 = vand.u32 2147483647, %v134
    %v137 = vand.u32 2147483647, %v135
    %v138 = vsub.f32 0.0, %v136
    %v139 = vsub.f32 0.0, %v137
    %v140 = vmul.f32 %v138, 1.442695
    %v141 = vpow.pop %v140
    %v142 = vmul.f32 %v139, 1.442695
    %v143 = vpow.pop %v142
    %v144 = vadd.f32 %v141, 1.0
    %v145 = vadd.f32 %v143, 1.0
    %v146 = vrcp.pop %v144
    %v147 = vrcp.pop %v145
    %vm148 = vcmp.ge.f32.partialorder %v134, 0.0
    %vm149 = vcmp.ge.f32.partialorder %v135, 0.0
    %v150 = vsub.f32 1.0, %v146
    %v151 = vsub.f32 1.0, %v147
    %v152 = vsel %vm148, %v146, %v150
    %v153 = vsel %vm149, %v147, %v151
    %v154 = vmul.f32 %v134, %v152
    %v155 = vmul.f32 %v135, %v153
    %v156 = vstv %s98
    %v157 = vmul.f32 %v128, %v156
    %v158 = vmul.f32 %v131, %v156
    %v159 = vand.u32 2147483647, %v157
    %v160 = vand.u32 2147483647, %v158
    %v161 = vsub.f32 0.0, %v159
    %v162 = vsub.f32 0.0, %v160
    %v163 = vmul.f32 %v161, 1.442695
    %v164 = vpow.pop %v163
    %v165 = vmul.f32 %v162, 1.442695
    %v166 = vpow.pop %v165
    %v167 = vadd.f32 %v164, 1.0
    %v168 = vadd.f32 %v166, 1.0
    %v169 = vrcp.pop %v167
    %v170 = vrcp.pop %v168
    %vm171 = vcmp.ge.f32.partialorder %v157, 0.0
    %vm172 = vcmp.ge.f32.partialorder %v158, 0.0
    %v173 = vsub.f32 1.0, %v169
    %v174 = vsub.f32 1.0, %v170
    %v175 = vsel %vm171, %v169, %v173
    %v176 = vsel %vm172, %v170, %v174
    %v177 = vmul.f32 %v157, %v175
    %v178 = vmul.f32 %v158, %v176
    %v179 = vld [vmem:[#allocation7] sm:$0xff]
    %v180 = vld [vmem:[#allocation7 + $0x8] sm:$0xff]
    %v181 = vld [vmem:[#allocation9] sm:$0xff]
    %v182 = vld [vmem:[#allocation9 + $0x8] sm:$0xff]
    %v184 = vsel %vm103, %v181, 0
    %v187 = vsel %vm103, %v182, 0
    %189 = vmatpush.msra.mxu0 0.0
    %190 = vmatpush.msra.mxu0 0.0
    %191 = vmatpush.msra.mxu0 0.0
    %192 = vmatpush.msra.mxu0 0.0
    %193 = vmatpush.msra.mxu0 0.0
    %194 = vmatpush.msra.mxu0 0.0
    %195 = vmatpush.msra.mxu0 0.0
    %196 = vmatpush.msra.mxu0 0.0
    %197 = vmatpush.msra.mxu0 0.0
    %198 = vmatpush.msra.mxu0 0.0
    %199 = vmatpush.msra.mxu0 0.0
    %200 = vmatpush.msra.mxu0 0.0
    %201 = vmatpush.msra.mxu0 0.0
    %202 = vmatpush.msra.mxu0 0.0
    %203 = vmatpush.msra.mxu0 %v178
    %204 = vmatpush.msra.mxu0 %v177
    %205 = vmatmul.f32.gmra.mxu0 %v184
    %v206 = vpop.f32.mrf.mxu0
    %v207 = vadd.f32 0.0, %v206
    %208 = vmatmul.f32.gmra.mxu0 %v187
    %v209 = vpop.f32.mrf.mxu0
    %v210 = vadd.f32 0.0, %v209
    %211 = vdwg.mxu0
    %v213 = vsel %vm103, %v179, 0
    %v216 = vsel %vm103, %v180, 0
    %218 = vmatpush.msra.mxu0 0.0
    %219 = vmatpush.msra.mxu0 0.0
    %220 = vmatpush.msra.mxu0 0.0
    %221 = vmatpush.msra.mxu0 0.0
    %222 = vmatpush.msra.mxu0 0.0
    %223 = vmatpush.msra.mxu0 0.0
    %224 = vmatpush.msra.mxu0 0.0
    %225 = vmatpush.msra.mxu0 0.0
    %226 = vmatpush.msra.mxu0 0.0
    %227 = vmatpush.msra.mxu0 0.0
    %228 = vmatpush.msra.mxu0 0.0
    %229 = vmatpush.msra.mxu0 0.0
    %230 = vmatpush.msra.mxu0 0.0
    %231 = vmatpush.msra.mxu0 0.0
    %232 = vmatpush.msra.mxu0 %v155
    %233 = vmatpush.msra.mxu0 %v154
    %234 = vmatmul.f32.gmra.mxu0 %v213
    %v235 = vpop.f32.mrf.mxu0
    %v236 = vadd.f32 %v207, %v235
    %237 = vmatmul.f32.gmra.mxu0 %v216
    %v238 = vpop.f32.mrf.mxu0
    %v239 = vadd.f32 %v210, %v238
    %240 = vdwg.mxu0
    %241 = vst [vmem:[#allocation12] sm:$0xff] %v236
    %242 = vst [vmem:[#allocation12 + $0x8] sm:$0xff] %v239
    // Predicated region
    $region42: #{tpu_custom_call.1} parent=1 // pred_check
      _
    $region43: #{tpu_custom_call.1} parent=1 // pred_check_branch
      %244 = sbr.rel (0) target = $region45
    $region44: #{tpu_custom_call.1} parent=1 // pred_region
      %246 = vsyncadd [#allocation4], 0
      %s247 = sshll.u32 [#allocation12], 4
      %s248 = int_to_ptr.vmem [resolvable:$true] %s247
      %s249 = sshll.u32 %s5, 4
      %s250 = int_to_ptr.hbm [resolvable:$true] %s249
      %255 = dma.vmem_to_hbm [thread:$0]  %s248, 256, %s250, [#allocation4], 128, 128, 8
    $region45: #{tpu_custom_call.1} parent=1 // pred_fallthru
      _
    // Predicated region
    $region46: #{tpu_custom_call.1} parent=1 // pred_check
      _
    $region47: #{tpu_custom_call.1} parent=1 // pred_check_branch
      %257 = sbr.rel (0) target = $region49
    $region48: #{tpu_custom_call.1} parent=1 // pred_region
      %259 = dma.done [#allocation4], 256
    $region49: #{tpu_custom_call.1} parent=1 // pred_fallthru
      _
    %260 = vsyncpa [#allocation3], 1
    %261 = vsyncpa [#allocation8], 1
    %262 = vsyncpa [#allocation11], 1
    %263 = vsyncpa [#allocation4], 1
    %264 = vsyncpa [#allocation5], 1

</llo_original>
